<compile_context>
chip_gen: v7x
topology: tpu7x:2x2x1
jax: 0.10.0
libtpu: 0.0.40
codegen_flags: <defaults>
</compile_context>

<pallas_src>
import functools
import math

import jax
import jax.numpy as jnp
from jax.experimental import pallas as pl
from jax.experimental.pallas import tpu as pltpu


def _ripu_kernel(pred_ref, inv_tot_ref, out_ref, wbuf, hbuf, *, size, use_entropy):
    # pred_ref: (C, H, W) softmax map for one batch element; out_ref: (H, W).
    C, H, W = pred_ref.shape
    pad = size // 2
    inv_log_c = 1.0 / math.log(C)

    # Zero the padded scratch buffers.  The interior is overwritten by every
    # box2d call; the borders must stay zero.  Zeroing unconditionally (instead
    # of only at program_id==0) stays correct under megacore grid sharding and
    # costs only ~2*H*W stores per step.
    wbuf[...] = jnp.zeros(wbuf.shape, jnp.float32)
    hbuf[...] = jnp.zeros(hbuf.shape, jnp.float32)

    def box2d(x):
        """size x size all-ones box sum with zero padding (separable shift-add).

        Shifts are static-offset loads from zero-padded VMEM scratch — no MXU,
        no band matrices, correct for any H, W, size.
        """
        # --- horizontal pass (lane axis) ---
        wbuf[:, pad:pad + W] = x
        t = wbuf[:, 0:W]
        for dx in range(1, size):
            t = t + wbuf[:, dx:dx + W]
        # --- vertical pass (sublane axis) ---
        hbuf[pad:pad + H, :] = t
        out = hbuf[0:H, :]
        for dy in range(1, size):
            out = out + hbuf[dy:dy + H, :]
        return out

    # ---- one fused pass over channels: argmax (+ optional pixel entropy). ----
    # Channels are loaded one (H, W) plane at a time; torch.argmax tie-break
    # (first occurrence) is preserved via strict '>'.
    x0 = pred_ref[0]
    best_val = x0
    best_idx = jnp.zeros((H, W), jnp.int32)
    pix_ent = (-x0 * jnp.log(x0 + 1e-6)) if use_entropy else None
    for c in range(1, C):
        xc = pred_ref[c]
        better = xc > best_val
        best_val = jnp.where(better, xc, best_val)
        best_idx = jnp.where(better, c, best_idx)
        if use_entropy:
            pix_ent = pix_ent + (-xc * jnp.log(xc + 1e-6))

    # 1 / (in-image window pixel count) — batch-independent, hoisted to the
    # wrapper and DMA'd once (constant index_map).
    inv_total = inv_tot_ref[...]

    # ---- stream per class: never materialize a (C, H, W) summary stack. ----
    region_impurity = jnp.zeros((H, W), jnp.float32)
    for c in range(C):
        d_c = box2d((best_idx == c).astype(jnp.float32)) * inv_total
        region_impurity = region_impurity + (-d_c * jnp.log(d_c + 1e-6))
    score = region_impurity * inv_log_c

    if use_entropy:
        pix = pix_ent * inv_log_c
        region_sum_entropy = box2d(pix)
        score = score * (region_sum_entropy * inv_total)

    out_ref[...] = score.astype(out_ref.dtype)


def _inv_window_count(H, W, pad):
    """1 / box(ones) with zero padding: exact in-image pixel count per window."""
    ih = jnp.arange(H, dtype=jnp.int32)[:, None]
    iw = jnp.arange(W, dtype=jnp.int32)[None, :]
    cnt_h = jnp.minimum(ih, pad) + jnp.minimum(H - 1 - ih, pad) + 1
    cnt_w = jnp.minimum(iw, pad) + jnp.minimum(W - 1 - iw, pad) + 1
    return 1.0 / (cnt_h * cnt_w).astype(jnp.float32)


def ripu_net(pred, size, use_entropy):
    """pred: (B, C, H, W) f32 softmax maps -> (B, H, W) f32 region-impurity scores."""
    assert size % 2 == 1, "size of the receptive field has to be an odd number."
    B, C, H, W = pred.shape
    assert C >= 2, "need at least 2 categories (log(C) normalization)."
    pad = size // 2

    inv_total = _inv_window_count(H, W, pad)          # (H, W) f32, batch-independent

    # Scoped-VMEM limit: query physical capacity when possible.  The fallback
    # stays below v7x's 64 MiB per-TC physical VMEM so double buffers and
    # internal scratch still have headroom (no-op on v5e/v6e's 128 MiB).
    vmem_limit = 48 * 1024 * 1024
    try:
        cap = int(pltpu.get_tpu_info().vmem_capacity_bytes)
        vmem_limit = (cap * 3) // 4
    except Exception:
        pass

    kernel = functools.partial(_ripu_kernel, size=size, use_entropy=use_entropy)
    return pl.pallas_call(
        kernel,
        out_shape=jax.ShapeDtypeStruct((B, H, W), jnp.float32),
        grid_spec=pltpu.PrefetchScalarGridSpec(
            num_scalar_prefetch=0,
            grid=(B,),
            in_specs=[
                pl.BlockSpec((pl.Squeezed(), C, H, W), lambda b: (b, 0, 0, 0)),
                pl.BlockSpec((H, W), lambda b: (0, 0)),   # inv_total: constant block
            ],
            out_specs=pl.BlockSpec((pl.Squeezed(), H, W), lambda b: (b, 0, 0)),
            scratch_shapes=[
                pltpu.VMEM((H, W + 2 * pad), jnp.float32),   # W-padded box scratch
                pltpu.VMEM((H + 2 * pad, W), jnp.float32),   # H-padded box scratch
            ],
        ),
        compiler_params=pltpu.CompilerParams(
            dimension_semantics=("parallel",),
            vmem_limit_bytes=vmem_limit,
        ),
    )(pred, inv_total)


def ripu_ref(pred, size, use_entropy):
    """Pure-JAX reference (pad + shift-add sliding window)."""
    B, C, H, W = pred.shape
    pad = size // 2
    cat = jnp.argmax(pred, axis=1)                    # (B, H, W)
    one_hot = jax.nn.one_hot(cat, C, axis=1, dtype=jnp.float32)

    def box(a):                                       # (..., H, W)
        ap = jnp.pad(a, [(0, 0)] * (a.ndim - 2) + [(pad, pad), (pad, pad)])
        out = jnp.zeros_like(a)
        for dy in range(size):
            for dx in range(size):
                out = out + ap[..., dy:dy + H, dx:dx + W]
        return out

    summary = box(one_hot)                            # (B, C, H, W)
    total = jnp.sum(summary, axis=1, keepdims=True)
    dist = summary / total
    score = jnp.sum(-dist * jnp.log(dist + 1e-6), axis=1) / math.log(C)
    if use_entropy:
        pix = jnp.sum(-pred * jnp.log(pred + 1e-6), axis=1) / math.log(C)
        region = box(pix)
        score = score * (region / total[:, 0])
    return score


if __name__ == "__main__":
    key = jax.random.PRNGKey(0)
    B, C, H, W = 2, 4, 16, 16
    size = 3

    logits = jax.random.normal(key, (B, C, H, W), dtype=jnp.float32)
    pred = jax.nn.softmax(logits, axis=1)             # (B, C, H, W)

    for use_entropy in (False, True):
        out = ripu_net(pred, size, use_entropy)
        out = jax.block_until_ready(out)
        ref = jax.block_until_ready(ripu_ref(pred, size, use_entropy))
        assert out.shape == (B, H, W) and out.dtype == jnp.float32
        assert jnp.allclose(out, ref, rtol=1e-5, atol=1e-5), (
            f"mismatch (use_entropy={use_entropy}): "
            f"{jnp.max(jnp.abs(out - ref))}")

    print("KERNEL_OK")
</pallas_src>

<mosaic_0001>
module attributes {stable_mosaic.version = 11 : i64} {
  func.func @_ripu_kernel(%arg0: i32, %arg1: memref<1x4x16x16xf32, #tpu.memory_space<vmem>>, %arg2: memref<16x16xf32, #tpu.memory_space<vmem>>, %arg3: memref<1x16x16xf32, #tpu.memory_space<vmem>>, %arg4: memref<16x18xf32, #tpu.memory_space<vmem>>, %arg5: memref<18x16xf32, #tpu.memory_space<vmem>>) attributes {dimension_semantics = [#tpu.dimension_semantics<parallel>], iteration_bounds = array<i64: 2>, scalar_prefetch = 0 : i64, scratch_operands = 2 : i64, tpu.core_type = #tpu.core_type<tc>, window_params = [{transform_indices = @transform_0, window_bounds = array<i64: 1, 4, 16, 16>}, {pipeline_mode = #tpu.pipeline_mode<synchronous>, transform_indices = @transform_1, window_bounds = array<i64: 16, 16>}, {transform_indices = @transform_2, window_bounds = array<i64: 1, 16, 16>}]} {
    %cst = arith.constant 0.000000e+00 : f32
    %0 = vector.broadcast %cst : f32 to vector<16x18xf32>
    %c0 = arith.constant 0 : index
    %c0_0 = arith.constant 0 : index
    %1 = vector.load %arg4[%c0, %c0_0] : memref<16x18xf32, #tpu.memory_space<vmem>>, vector<16x18xf32>
    tpu.vector_store %arg4[%c0, %c0_0], %0 {strides = array<i32>} : memref<16x18xf32, #tpu.memory_space<vmem>>, vector<16x18xf32>,
    %cst_1 = arith.constant 0.000000e+00 : f32
    %2 = vector.broadcast %cst_1 : f32 to vector<18x16xf32>
    %c0_2 = arith.constant 0 : index
    %c0_3 = arith.constant 0 : index
    %3 = vector.load %arg5[%c0_2, %c0_3] : memref<18x16xf32, #tpu.memory_space<vmem>>, vector<18x16xf32>
    tpu.vector_store %arg5[%c0_2, %c0_3], %2 {strides = array<i32>} : memref<18x16xf32, #tpu.memory_space<vmem>>, vector<18x16xf32>,
    %c0_4 = arith.constant 0 : index
    %c0_5 = arith.constant 0 : index
    %c0_6 = arith.constant 0 : index
    %c0_7 = arith.constant 0 : index
    %4 = vector.load %arg1[%c0_4, %c0_5, %c0_6, %c0_7] : memref<1x4x16x16xf32, #tpu.memory_space<vmem>>, vector<1x1x16x16xf32>
    %5 = vector.shape_cast %4 : vector<1x1x16x16xf32> to vector<16x16xf32>
    %c0_i32 = arith.constant 0 : i32
    %6 = vector.broadcast %c0_i32 : i32 to vector<16x16xi32>
    %c0_8 = arith.constant 0 : index
    %c1 = arith.constant 1 : index
    %c0_9 = arith.constant 0 : index
    %c0_10 = arith.constant 0 : index
    %7 = vector.load %arg1[%c0_8, %c1, %c0_9, %c0_10] : memref<1x4x16x16xf32, #tpu.memory_space<vmem>>, vector<1x1x16x16xf32>
    %8 = vector.shape_cast %7 : vector<1x1x16x16xf32> to vector<16x16xf32>
    %9 = arith.cmpf ogt, %8, %5 : vector<16x16xf32>
    %10 = arith.select %9, %8, %5 : vector<16x16xi1>, vector<16x16xf32>
    %c1_i32 = arith.constant 1 : i32
    %11 = vector.broadcast %c1_i32 : i32 to vector<16x16xi32>
    %12 = arith.select %9, %11, %6 : vector<16x16xi1>, vector<16x16xi32>
    %c0_11 = arith.constant 0 : index
    %c2 = arith.constant 2 : index
    %c0_12 = arith.constant 0 : index
    %c0_13 = arith.constant 0 : index
    %13 = vector.load %arg1[%c0_11, %c2, %c0_12, %c0_13] : memref<1x4x16x16xf32, #tpu.memory_space<vmem>>, vector<1x1x16x16xf32>
    %14 = vector.shape_cast %13 : vector<1x1x16x16xf32> to vector<16x16xf32>
    %15 = arith.cmpf ogt, %14, %10 : vector<16x16xf32>
    %16 = arith.select %15, %14, %10 : vector<16x16xi1>, vector<16x16xf32>
    %c2_i32 = arith.constant 2 : i32
    %17 = vector.broadcast %c2_i32 : i32 to vector<16x16xi32>
    %18 = arith.select %15, %17, %12 : vector<16x16xi1>, vector<16x16xi32>
    %c0_14 = arith.constant 0 : index
    %c3 = arith.constant 3 : index
    %c0_15 = arith.constant 0 : index
    %c0_16 = arith.constant 0 : index
    %19 = vector.load %arg1[%c0_14, %c3, %c0_15, %c0_16] : memref<1x4x16x16xf32, #tpu.memory_space<vmem>>, vector<1x1x16x16xf32>
    %20 = vector.shape_cast %19 : vector<1x1x16x16xf32> to vector<16x16xf32>
    %21 = arith.cmpf ogt, %20, %16 : vector<16x16xf32>
    %c3_i32 = arith.constant 3 : i32
    %22 = vector.broadcast %c3_i32 : i32 to vector<16x16xi32>
    %23 = arith.select %21, %22, %18 : vector<16x16xi1>, vector<16x16xi32>
    %c0_17 = arith.constant 0 : index
    %c0_18 = arith.constant 0 : index
    %24 = vector.load %arg2[%c0_17, %c0_18] : memref<16x16xf32, #tpu.memory_space<vmem>>, vector<16x16xf32>
    %cst_19 = arith.constant 0.000000e+00 : f32
    %25 = vector.broadcast %cst_19 : f32 to vector<16x16xf32>
    %c0_i32_20 = arith.constant 0 : i32
    %26 = vector.broadcast %c0_i32_20 : i32 to vector<16x16xi32>
    %27 = arith.cmpi eq, %23, %26 : vector<16x16xi32>
    %28 = arith.extui %27 : vector<16x16xi1> to vector<16x16xi32>
    %29 = arith.sitofp %28 : vector<16x16xi32> to vector<16x16xf32>
    %c0_21 = arith.constant 0 : index
    %c1_22 = arith.constant 1 : index
    %30 = vector.load %arg4[%c0_21, %c1_22] : memref<16x18xf32, #tpu.memory_space<vmem>>, vector<16x16xf32>
    tpu.vector_store %arg4[%c0_21, %c1_22], %29 {strides = array<i32>} : memref<16x18xf32, #tpu.memory_space<vmem>>, vector<16x16xf32>,
    %c0_23 = arith.constant 0 : index
    %c0_24 = arith.constant 0 : index
    %31 = vector.load %arg4[%c0_23, %c0_24] : memref<16x18xf32, #tpu.memory_space<vmem>>, vector<16x16xf32>
    %c0_25 = arith.constant 0 : index
    %c1_26 = arith.constant 1 : index
    %32 = vector.load %arg4[%c0_25, %c1_26] : memref<16x18xf32, #tpu.memory_space<vmem>>, vector<16x16xf32>
    %33 = arith.addf %31, %32 : vector<16x16xf32>
    %c0_27 = arith.constant 0 : index
    %c2_28 = arith.constant 2 : index
    %34 = vector.load %arg4[%c0_27, %c2_28] : memref<16x18xf32, #tpu.memory_space<vmem>>, vector<16x16xf32>
    %35 = arith.addf %33, %34 : vector<16x16xf32>
    %c1_29 = arith.constant 1 : index
    %c0_30 = arith.constant 0 : index
    %36 = vector.load %arg5[%c1_29, %c0_30] : memref<18x16xf32, #tpu.memory_space<vmem>>, vector<16x16xf32>
    tpu.vector_store %arg5[%c1_29, %c0_30], %35 {strides = array<i32>} : memref<18x16xf32, #tpu.memory_space<vmem>>, vector<16x16xf32>,
    %c0_31 = arith.constant 0 : index
    %c0_32 = arith.constant 0 : index
    %37 = vector.load %arg5[%c0_31, %c0_32] : memref<18x16xf32, #tpu.memory_space<vmem>>, vector<16x16xf32>
    %c1_33 = arith.constant 1 : index
    %c0_34 = arith.constant 0 : index
    %38 = vector.load %arg5[%c1_33, %c0_34] : memref<18x16xf32, #tpu.memory_space<vmem>>, vector<16x16xf32>
    %39 = arith.addf %37, %38 : vector<16x16xf32>
    %c2_35 = arith.constant 2 : index
    %c0_36 = arith.constant 0 : index
    %40 = vector.load %arg5[%c2_35, %c0_36] : memref<18x16xf32, #tpu.memory_space<vmem>>, vector<16x16xf32>
    %41 = arith.addf %39, %40 : vector<16x16xf32>
    %42 = arith.mulf %41, %24 : vector<16x16xf32>
    %cst_37 = arith.constant 0.000000e+00 : f32
    %43 = vector.broadcast %cst_37 : f32 to vector<16x16xf32>
    %44 = arith.subf %43, %42 : vector<16x16xf32>
    %cst_38 = arith.constant 9.99999997E-7 : f32
    %45 = vector.broadcast %cst_38 : f32 to vector<16x16xf32>
    %46 = arith.addf %42, %45 : vector<16x16xf32>
    %47 = math.log %46 : vector<16x16xf32>
    %48 = arith.mulf %44, %47 : vector<16x16xf32>
    %49 = arith.addf %25, %48 : vector<16x16xf32>
    %c1_i32_39 = arith.constant 1 : i32
    %50 = vector.broadcast %c1_i32_39 : i32 to vector<16x16xi32>
    %51 = arith.cmpi eq, %23, %50 : vector<16x16xi32>
    %52 = arith.extui %51 : vector<16x16xi1> to vector<16x16xi32>
    %53 = arith.sitofp %52 : vector<16x16xi32> to vector<16x16xf32>
    %c0_40 = arith.constant 0 : index
    %c1_41 = arith.constant 1 : index
    %54 = vector.load %arg4[%c0_40, %c1_41] : memref<16x18xf32, #tpu.memory_space<vmem>>, vector<16x16xf32>
    tpu.vector_store %arg4[%c0_40, %c1_41], %53 {strides = array<i32>} : memref<16x18xf32, #tpu.memory_space<vmem>>, vector<16x16xf32>,
    %c0_42 = arith.constant 0 : index
    %c0_43 = arith.constant 0 : index
    %55 = vector.load %arg4[%c0_42, %c0_43] : memref<16x18xf32, #tpu.memory_space<vmem>>, vector<16x16xf32>
    %c0_44 = arith.constant 0 : index
    %c1_45 = arith.constant 1 : index
    %56 = vector.load %arg4[%c0_44, %c1_45] : memref<16x18xf32, #tpu.memory_space<vmem>>, vector<16x16xf32>
    %57 = arith.addf %55, %56 : vector<16x16xf32>
    %c0_46 = arith.constant 0 : index
    %c2_47 = arith.constant 2 : index
    %58 = vector.load %arg4[%c0_46, %c2_47] : memref<16x18xf32, #tpu.memory_space<vmem>>, vector<16x16xf32>
    %59 = arith.addf %57, %58 : vector<16x16xf32>
    %c1_48 = arith.constant 1 : index
    %c0_49 = arith.constant 0 : index
    %60 = vector.load %arg5[%c1_48, %c0_49] : memref<18x16xf32, #tpu.memory_space<vmem>>, vector<16x16xf32>
    tpu.vector_store %arg5[%c1_48, %c0_49], %59 {strides = array<i32>} : memref<18x16xf32, #tpu.memory_space<vmem>>, vector<16x16xf32>,
    %c0_50 = arith.constant 0 : index
    %c0_51 = arith.constant 0 : index
    %61 = vector.load %arg5[%c0_50, %c0_51] : memref<18x16xf32, #tpu.memory_space<vmem>>, vector<16x16xf32>
    %c1_52 = arith.constant 1 : index
    %c0_53 = arith.constant 0 : index
    %62 = vector.load %arg5[%c1_52, %c0_53] : memref<18x16xf32, #tpu.memory_space<vmem>>, vector<16x16xf32>
    %63 = arith.addf %61, %62 : vector<16x16xf32>
    %c2_54 = arith.constant 2 : index
    %c0_55 = arith.constant 0 : index
    %64 = vector.load %arg5[%c2_54, %c0_55] : memref<18x16xf32, #tpu.memory_space<vmem>>, vector<16x16xf32>
    %65 = arith.addf %63, %64 : vector<16x16xf32>
    %66 = arith.mulf %65, %24 : vector<16x16xf32>
    %cst_56 = arith.constant 0.000000e+00 : f32
    %67 = vector.broadcast %cst_56 : f32 to vector<16x16xf32>
    %68 = arith.subf %67, %66 : vector<16x16xf32>
    %cst_57 = arith.constant 9.99999997E-7 : f32
    %69 = vector.broadcast %cst_57 : f32 to vector<16x16xf32>
    %70 = arith.addf %66, %69 : vector<16x16xf32>
    %71 = math.log %70 : vector<16x16xf32>
    %72 = arith.mulf %68, %71 : vector<16x16xf32>
    %73 = arith.addf %49, %72 : vector<16x16xf32>
    %c2_i32_58 = arith.constant 2 : i32
    %74 = vector.broadcast %c2_i32_58 : i32 to vector<16x16xi32>
    %75 = arith.cmpi eq, %23, %74 : vector<16x16xi32>
    %76 = arith.extui %75 : vector<16x16xi1> to vector<16x16xi32>
    %77 = arith.sitofp %76 : vector<16x16xi32> to vector<16x16xf32>
    %c0_59 = arith.constant 0 : index
    %c1_60 = arith.constant 1 : index
    %78 = vector.load %arg4[%c0_59, %c1_60] : memref<16x18xf32, #tpu.memory_space<vmem>>, vector<16x16xf32>
    tpu.vector_store %arg4[%c0_59, %c1_60], %77 {strides = array<i32>} : memref<16x18xf32, #tpu.memory_space<vmem>>, vector<16x16xf32>,
    %c0_61 = arith.constant 0 : index
    %c0_62 = arith.constant 0 : index
    %79 = vector.load %arg4[%c0_61, %c0_62] : memref<16x18xf32, #tpu.memory_space<vmem>>, vector<16x16xf32>
    %c0_63 = arith.constant 0 : index
    %c1_64 = arith.constant 1 : index
    %80 = vector.load %arg4[%c0_63, %c1_64] : memref<16x18xf32, #tpu.memory_space<vmem>>, vector<16x16xf32>
    %81 = arith.addf %79, %80 : vector<16x16xf32>
    %c0_65 = arith.constant 0 : index
    %c2_66 = arith.constant 2 : index
    %82 = vector.load %arg4[%c0_65, %c2_66] : memref<16x18xf32, #tpu.memory_space<vmem>>, vector<16x16xf32>
    %83 = arith.addf %81, %82 : vector<16x16xf32>
    %c1_67 = arith.constant 1 : index
    %c0_68 = arith.constant 0 : index
    %84 = vector.load %arg5[%c1_67, %c0_68] : memref<18x16xf32, #tpu.memory_space<vmem>>, vector<16x16xf32>
    tpu.vector_store %arg5[%c1_67, %c0_68], %83 {strides = array<i32>} : memref<18x16xf32, #tpu.memory_space<vmem>>, vector<16x16xf32>,
    %c0_69 = arith.constant 0 : index
    %c0_70 = arith.constant 0 : index
    %85 = vector.load %arg5[%c0_69, %c0_70] : memref<18x16xf32, #tpu.memory_space<vmem>>, vector<16x16xf32>
    %c1_71 = arith.constant 1 : index
    %c0_72 = arith.constant 0 : index
    %86 = vector.load %arg5[%c1_71, %c0_72] : memref<18x16xf32, #tpu.memory_space<vmem>>, vector<16x16xf32>
    %87 = arith.addf %85, %86 : vector<16x16xf32>
    %c2_73 = arith.constant 2 : index
    %c0_74 = arith.constant 0 : index
    %88 = vector.load %arg5[%c2_73, %c0_74] : memref<18x16xf32, #tpu.memory_space<vmem>>, vector<16x16xf32>
    %89 = arith.addf %87, %88 : vector<16x16xf32>
    %90 = arith.mulf %89, %24 : vector<16x16xf32>
    %cst_75 = arith.constant 0.000000e+00 : f32
    %91 = vector.broadcast %cst_75 : f32 to vector<16x16xf32>
    %92 = arith.subf %91, %90 : vector<16x16xf32>
    %cst_76 = arith.constant 9.99999997E-7 : f32
    %93 = vector.broadcast %cst_76 : f32 to vector<16x16xf32>
    %94 = arith.addf %90, %93 : vector<16x16xf32>
    %95 = math.log %94 : vector<16x16xf32>
    %96 = arith.mulf %92, %95 : vector<16x16xf32>
    %97 = arith.addf %73, %96 : vector<16x16xf32>
    %c3_i32_77 = arith.constant 3 : i32
    %98 = vector.broadcast %c3_i32_77 : i32 to vector<16x16xi32>
    %99 = arith.cmpi eq, %23, %98 : vector<16x16xi32>
    %100 = arith.extui %99 : vector<16x16xi1> to vector<16x16xi32>
    %101 = arith.sitofp %100 : vector<16x16xi32> to vector<16x16xf32>
    %c0_78 = arith.constant 0 : index
    %c1_79 = arith.constant 1 : index
    %102 = vector.load %arg4[%c0_78, %c1_79] : memref<16x18xf32, #tpu.memory_space<vmem>>, vector<16x16xf32>
    tpu.vector_store %arg4[%c0_78, %c1_79], %101 {strides = array<i32>} : memref<16x18xf32, #tpu.memory_space<vmem>>, vector<16x16xf32>,
    %c0_80 = arith.constant 0 : index
    %c0_81 = arith.constant 0 : index
    %103 = vector.load %arg4[%c0_80, %c0_81] : memref<16x18xf32, #tpu.memory_space<vmem>>, vector<16x16xf32>
    %c0_82 = arith.constant 0 : index
    %c1_83 = arith.constant 1 : index
    %104 = vector.load %arg4[%c0_82, %c1_83] : memref<16x18xf32, #tpu.memory_space<vmem>>, vector<16x16xf32>
    %105 = arith.addf %103, %104 : vector<16x16xf32>
    %c0_84 = arith.constant 0 : index
    %c2_85 = arith.constant 2 : index
    %106 = vector.load %arg4[%c0_84, %c2_85] : memref<16x18xf32, #tpu.memory_space<vmem>>, vector<16x16xf32>
    %107 = arith.addf %105, %106 : vector<16x16xf32>
    %c1_86 = arith.constant 1 : index
    %c0_87 = arith.constant 0 : index
    %108 = vector.load %arg5[%c1_86, %c0_87] : memref<18x16xf32, #tpu.memory_space<vmem>>, vector<16x16xf32>
    tpu.vector_store %arg5[%c1_86, %c0_87], %107 {strides = array<i32>} : memref<18x16xf32, #tpu.memory_space<vmem>>, vector<16x16xf32>,
    %c0_88 = arith.constant 0 : index
    %c0_89 = arith.constant 0 : index
    %109 = vector.load %arg5[%c0_88, %c0_89] : memref<18x16xf32, #tpu.memory_space<vmem>>, vector<16x16xf32>
    %c1_90 = arith.constant 1 : index
    %c0_91 = arith.constant 0 : index
    %110 = vector.load %arg5[%c1_90, %c0_91] : memref<18x16xf32, #tpu.memory_space<vmem>>, vector<16x16xf32>
    %111 = arith.addf %109, %110 : vector<16x16xf32>
    %c2_92 = arith.constant 2 : index
    %c0_93 = arith.constant 0 : index
    %112 = vector.load %arg5[%c2_92, %c0_93] : memref<18x16xf32, #tpu.memory_space<vmem>>, vector<16x16xf32>
    %113 = arith.addf %111, %112 : vector<16x16xf32>
    %114 = arith.mulf %113, %24 : vector<16x16xf32>
    %cst_94 = arith.constant 0.000000e+00 : f32
    %115 = vector.broadcast %cst_94 : f32 to vector<16x16xf32>
    %116 = arith.subf %115, %114 : vector<16x16xf32>
    %cst_95 = arith.constant 9.99999997E-7 : f32
    %117 = vector.broadcast %cst_95 : f32 to vector<16x16xf32>
    %118 = arith.addf %114, %117 : vector<16x16xf32>
    %119 = math.log %118 : vector<16x16xf32>
    %120 = arith.mulf %116, %119 : vector<16x16xf32>
    %121 = arith.addf %97, %120 : vector<16x16xf32>
    %cst_96 = arith.constant 0.72134751 : f32
    %122 = vector.broadcast %cst_96 : f32 to vector<16x16xf32>
    %123 = arith.mulf %121, %122 : vector<16x16xf32>
    %c0_97 = arith.constant 0 : index
    %c0_98 = arith.constant 0 : index
    %c0_99 = arith.constant 0 : index
    %124 = vector.load %arg3[%c0_97, %c0_98, %c0_99] : memref<1x16x16xf32, #tpu.memory_space<vmem>>, vector<1x16x16xf32>
    %125 = vector.shape_cast %124 : vector<1x16x16xf32> to vector<16x16xf32>
    %126 = vector.shape_cast %123 : vector<16x16xf32> to vector<1x16x16xf32>
    tpu.vector_store %arg3[%c0_97, %c0_98, %c0_99], %126 {strides = array<i32>} : memref<1x16x16xf32, #tpu.memory_space<vmem>>, vector<1x16x16xf32>,
    return
  }
  func.func @transform_0(%arg0: i32) -> (i32, i32, i32, i32) {
    %c0_i32 = arith.constant 0 : i32
    %c0_i32_0 = arith.constant 0 : i32
    %c0_i32_1 = arith.constant 0 : i32
    %c0_i32_2 = arith.constant 0 : i32
    return %arg0, %c0_i32, %c0_i32_0, %c0_i32_1 : i32, i32, i32, i32
  }
  func.func @transform_1(%arg0: i32) -> (i32, i32) {
    %c0_i32 = arith.constant 0 : i32
    %c0_i32_0 = arith.constant 0 : i32
    %c0_i32_1 = arith.constant 0 : i32
    return %c0_i32, %c0_i32_0 : i32, i32
  }
  func.func @transform_2(%arg0: i32) -> (i32, i32, i32) {
    %c0_i32 = arith.constant 0 : i32
    %c0_i32_0 = arith.constant 0 : i32
    %c0_i32_1 = arith.constant 0 : i32
    return %arg0, %c0_i32, %c0_i32_0 : i32, i32, i32
  }
}

</mosaic_0001>

<llo_original>
// kernel: tpu_custom_call.1
$region0: #{tpu_custom_call.1}
  #allocation0 [shape = 'u32[]', space=smem, size = 0x4, offset = 0x4, fixed_abs, tag = 'smem constant byte address 0x4 - core index']
  #allocation1 [shape = 'u32[144,128]{1,0:T(1,128)}', space=vmem, size = 0x12000, scoped, tag = 'internal scratch']
  #allocation2 [shape = 'f32[16,18]{1,0:T(8,128)}', space=vmem, size = 0x2000, scoped, tag = 'scratch operand']
  #allocation3 [shape = 'f32[18,16]{1,0:T(8,128)}', space=vmem, size = 0x3000, scoped, tag = 'scratch operand']
  %s0 = inlined_call_operand.hbm [shape: f32[2,4,16,16], index: 0, kind: input, shape index: {}]
  %s1 = inlined_call_operand.hbm [shape: f32[16,16], index: 1, kind: input, shape index: {}]
  %s2 = inlined_call_operand.hbm [shape: f32[2,16,16], index: 2, kind: output, shape index: {}]
  %s3 = sld [smem:[#allocation0]]
  $region49: #{tpu_custom_call.1} parent=0
    _
  %s5 = ssub.s32 1, %s3
  %s6 = scalar_select 0, %s5, %s3
  $region1: #{tpu_custom_call.1} parent=0
    #allocation4 [shape = 'u8[65536]{0}', space=vmem, size = 0x10000, scoped, tag = 'input window, operand 0']
    #allocation5 [shape = 's32[2]{0}', space=sflag, size = 0x8, scoped, tag = 'scoped memory for tpu_custom_call.1']
    #allocation6 [shape = 's32[2]{0}', space=sflag, size = 0x8, scoped, tag = 'scoped memory for tpu_custom_call.1']
    #allocation7 [shape = 'u8[8192]{0}', space=vmem, size = 0x2000, scoped, tag = 'input window, operand 1, single buffered']
    #allocation8 [shape = 's32[1]{0}', space=sflag, size = 0x4, scoped, tag = 'scoped memory for tpu_custom_call.1']
    #allocation9 [shape = 'u8[16384]{0}', space=vmem, size = 0x4000, scoped, tag = 'output window, operand 0']
    %7 = vsyncpa [#allocation5], 0
    %s8 = scalar_lea.sflag [#allocation5], 1
    %9 = vsyncpa %s8, 0
    %10 = vsyncpa [#allocation8], 0
    %11 = vsyncpa [#allocation6], 0
    %s12 = scalar_lea.sflag [#allocation6], 1
    %13 = vsyncpa %s12, 0
    loop: start=0, step=1, limit=4
    $region2: #{tpu_custom_call.1} parent=1 // loop_pre_header
      _
    $region3: #{tpu_custom_call.1} parent=1 // loop_header
      %s15 = sphi 0, %s19
      %p16 = scmp.ge.s32.totalorder %s15, 4
      %s25 = sphi 0, %s27
      %s28 = sphi 0, %s25
      %s29 = sphi 0, %s28
      %s45 = sphi 0, %s29
      %s49 = sphi 0, %s49
      %s51 = sphi 0, %s49
      %s52 = sphi 0, %s51
      %s66 = sphi 0, %s52
      %s72 = sphi 0, %s74
      %s75 = sphi 0, %s72
      %s76 = sphi 0, %s75
      %s92 = sphi 0, %s76
    $region4: #{tpu_custom_call.1} parent=1 // loop_header_branch
      %18 = sbr.rel (%p16) target = $region8
    $region5: #{tpu_custom_call.1} parent=1 // loop_body
      %s20 = ssub.s32 %s15, 1
      %s21 = ssub.s32 %s15, 2
      %s22 = sadd.s32 %s15, 1
      %s23 = ssub.s32 %s15, %s22
      %p24 = scmp.eq.s32.totalorder %s23, 0
      %s26 = sadd.s32 %s25, 1
      %s27 = scalar_select %p24, %s25, %s26
      %p30 = pneg %p24
      %p31 = scmp.eq.s32.totalorder %s15, 1
      %p32 = por %p30, %p31
      %p33 = scmp.ne.s32.totalorder %s25, %s28
      %p34 = scmp.eq.s32.totalorder %s15, 0
      %p35 = por %p33, %p34
      %p36 = scmp.ne.s32.totalorder %s25, %s28
      %p37 = scmp.eq.s32.totalorder %s20, 1
      %p38 = por %p36, %p37
      %p39 = scmp.ne.s32.totalorder %s28, %s29
      %p40 = scmp.eq.s32.totalorder %s20, 0
      %p41 = por %p39, %p40
      %p42 = scmp.ne.s32.totalorder %s28, %s29
      %p43 = scmp.eq.s32.totalorder %s21, 1
      %p44 = por %p42, %p43
      %p46 = scmp.ne.s32.totalorder %s29, %s45
      %p47 = scmp.eq.s32.totalorder %s21, 0
      %p48 = por %p46, %p47
      %s50 = sadd.s32 %s49, 1
      %p53 = scmp.eq.s32.totalorder %s15, 1
      %p54 = scmp.ne.s32.totalorder %s49, %s51
      %p55 = scmp.eq.s32.totalorder %s15, 0
      %p56 = por %p54, %p55
      %p57 = scmp.ne.s32.totalorder %s49, %s51
      %p58 = scmp.eq.s32.totalorder %s20, 1
      %p59 = por %p57, %p58
      %p60 = scmp.ne.s32.totalorder %s51, %s52
      %p61 = scmp.eq.s32.totalorder %s20, 0
      %p62 = por %p60, %p61
      %p63 = scmp.ne.s32.totalorder %s51, %s52
      %p64 = scmp.eq.s32.totalorder %s21, 1
      %p65 = por %p63, %p64
      %p67 = scmp.ne.s32.totalorder %s52, %s66
      %p68 = scmp.eq.s32.totalorder %s21, 0
      %p69 = por %p67, %p68
      %s70 = ssub.s32 %s15, %s22
      %p71 = scmp.eq.s32.totalorder %s70, 0
      %s73 = sadd.s32 %s72, 1
      %s74 = scalar_select %p71, %s72, %s73
      %p77 = pneg %p71
      %p78 = scmp.eq.s32.totalorder %s15, 1
      %p79 = por %p77, %p78
      %p80 = scmp.ne.s32.totalorder %s72, %s75
      %p81 = scmp.eq.s32.totalorder %s15, 0
      %p82 = por %p80, %p81
      %p83 = scmp.ne.s32.totalorder %s72, %s75
      %p84 = scmp.eq.s32.totalorder %s20, 1
      %p85 = por %p83, %p84
      %p86 = scmp.ne.s32.totalorder %s75, %s76
      %p87 = scmp.eq.s32.totalorder %s20, 0
      %p88 = por %p86, %p87
      %p89 = scmp.ne.s32.totalorder %s75, %s76
      %p90 = scmp.eq.s32.totalorder %s21, 1
      %p91 = por %p89, %p90
      %p93 = scmp.ne.s32.totalorder %s76, %s92
      %p94 = scmp.eq.s32.totalorder %s21, 0
      %p95 = por %p93, %p94
      %p96 = scmp.le.s32.totalorder 1, %s15
      %p97 = scmp.lt.s32.totalorder %s15, 3
      %p98 = pnand %p96, %p97
      %p99 = pneg %p98
      // Predicated region
      $region9: #{tpu_custom_call.1} parent=5 // pred_check
        _
      $region10: #{tpu_custom_call.1} parent=5 // pred_check_branch
        %101 = sbr.rel (%p98) target = $region12
      $region11: #{tpu_custom_call.1} parent=5 // pred_region
        %s102 = ssub.s32 %s15, 1
        // Predicated region
        $region13: #{tpu_custom_call.1} parent=11 // pred_check
          %p103 = pneg %p62
        $region14: #{tpu_custom_call.1} parent=11 // pred_check_branch
          %105 = sbr.rel (%p103) target = $region16
        $region15: #{tpu_custom_call.1} parent=11 // pred_region
          %s107 = ssub.s32 256, 256
          %108 = vsyncadd [#allocation8], %s107
          %s109 = sshll.u32 [#allocation7], 4
          %s110 = int_to_ptr.vmem [resolvable:$true] %s109
          %115 = dma.hbm_to_vmem [thread:$0]  %s1, 256, %s110, [#allocation8], 128, 128, 8
        $region16: #{tpu_custom_call.1} parent=11 // pred_fallthru
          _
      $region12: #{tpu_custom_call.1} parent=5 // pred_fallthru
        _
      %p116 = scmp.lt.s32.totalorder %s15, 2
      // Predicated region
      $region17: #{tpu_custom_call.1} parent=5 // pred_check
        %p117 = pneg %p116
      $region18: #{tpu_custom_call.1} parent=5 // pred_check_branch
        %119 = sbr.rel (%p117) target = $region20
      $region19: #{tpu_custom_call.1} parent=5 // pred_region
        // Predicated region
        $region21: #{tpu_custom_call.1} parent=19 // pred_check
          %p120 = pneg %p35
        $region22: #{tpu_custom_call.1} parent=19 // pred_check_branch
          %122 = sbr.rel (%p120) target = $region24
        $region23: #{tpu_custom_call.1} parent=19 // pred_region
          %s123 = sand.u32 %s25, 1
          %s124 = scalar_lea.sflag [#allocation5], %s123
          %s125 = sand.u32 %s25, 1
          %s126 = smul.addr %s125, 64
          %s127 = scalar_lea.vmem [#allocation4], %s126
          %s129 = ssub.s32 1024, 1024
          %130 = vsyncadd %s124, %s129
          %s131 = smul.addr %s15, 8
          %s132 = smul.addr %s131, 128
          %s133 = scalar_lea.hbm %s0, %s132
          %s134 = sshll.u32 %s127, 4
          %s135 = int_to_ptr.vmem [resolvable:$true] %s134
          %140 = dma.hbm_to_vmem [thread:$0]  %s133, 1024, %s135, %s124, 128, 128, 8
        $region24: #{tpu_custom_call.1} parent=19 // pred_fallthru
          _
      $region20: #{tpu_custom_call.1} parent=5 // pred_fallthru
        _
      %p141 = scmp.le.s32.totalorder 1, %s15
      %p142 = scmp.lt.s32.totalorder %s15, 3
      %p143 = pnand %p141, %p142
      %p144 = pneg %p143
      // Predicated region
      $region25: #{tpu_custom_call.1} parent=5 // pred_check
        _
      $region26: #{tpu_custom_call.1} parent=5 // pred_check_branch
        %146 = sbr.rel (%p143) target = $region28
      $region27: #{tpu_custom_call.1} parent=5 // pred_region
        %s147 = ssub.s32 %s15, 1
        %s148 = sand.u32 %s28, 1
        %s149 = scalar_lea.sflag [#allocation5], %s148
        %s150 = sand.u32 %s28, 1
        %s151 = smul.addr %s150, 64
        %s152 = scalar_lea.vmem [#allocation4], %s151
        // Predicated region
        $region29: #{tpu_custom_call.1} parent=27 // pred_check
          %p153 = pneg %p41
        $region30: #{tpu_custom_call.1} parent=27 // pred_check_branch
          %155 = sbr.rel (%p153) target = $region32
        $region31: #{tpu_custom_call.1} parent=27 // pred_region
          %156 = dma.done %s149, 1024
        $region32: #{tpu_custom_call.1} parent=27 // pred_fallthru
          _
        // Predicated region
        $region33: #{tpu_custom_call.1} parent=27 // pred_check
          %p157 = pneg %p62
        $region34: #{tpu_custom_call.1} parent=27 // pred_check_branch
          %159 = sbr.rel (%p157) target = $region36
        $region35: #{tpu_custom_call.1} parent=27 // pred_region
          %160 = dma.done [#allocation8], 256
        $region36: #{tpu_custom_call.1} parent=27 // pred_fallthru
          _
        %s161 = sand.u32 %s28, 1
        %s162 = scalar_lea.sflag [#allocation5], %s161
        %s163 = sand.u32 %s28, 1
        %s164 = smul.addr %s163, 64
        %s165 = scalar_lea.vmem [#allocation4], %s164
        %p166 = pneg %p41
        %p167 = pneg %p38
        %p168 = pneg %p62
        %p169 = pneg %p59
        %p170 = pneg %p88
        %p171 = pneg %p85
        %s172 = sand.u32 %s75, 1
        %s173 = scalar_lea.sflag [#allocation6], %s172
        %s174 = sand.u32 %s75, 1
        %s175 = smul.addr %s174, 16
        %s176 = scalar_lea.vmem [#allocation9], %s175
        %vm177 = vcmask 146432
        %178 = vst.msk [vmem:[#allocation2] sm:$0xff] %vm177, 0.0
        %179 = vst.msk [vmem:[#allocation2 + $0x8] sm:$0xff] %vm177, 0.0
        %vm180 = vcmask 130048
        %181 = vst.msk [vmem:[#allocation3] sm:$0xff] %vm180, 0.0
        %182 = vst.msk [vmem:[#allocation3 + $0x8] sm:$0xff] %vm180, 0.0
        %vm183 = vcmask 123904
        %184 = vst.msk [vmem:[#allocation3 + $0x10] sm:$0x3] %vm183, 0.0
        %v185 = vld [vmem:[%s152] sm:$0xff]
        %v186 = vld [vmem:[%s152 + $0x8] sm:$0xff]
        %s187 = scalar_lea.vmem %s152, 16 [#allocation4]
        %v188 = vld [vmem:[%s187] sm:$0xff]
        %v189 = vld [vmem:[%s187 + $0x8] sm:$0xff]
        %vm190 = vcmp.gt.f32.partialorder %v188, %v185
        %vm191 = vcmp.gt.f32.partialorder %v189, %v186
        %v192 = vsel %vm190, %v188, %v185
        %v193 = vsel %vm191, %v189, %v186
        %v194 = vsel %vm190, 1, 0
        %v195 = vsel %vm191, 1, 0
        %s196 = scalar_lea.vmem %s152, 32 [#allocation4]
        %v197 = vld [vmem:[%s196] sm:$0xff]
        %v198 = vld [vmem:[%s196 + $0x8] sm:$0xff]
        %vm199 = vcmp.gt.f32.partialorder %v197, %v192
        %vm200 = vcmp.gt.f32.partialorder %v198, %v193
        %v201 = vsel %vm199, %v197, %v192
        %v202 = vsel %vm200, %v198, %v193
        %v203 = vsel %vm199, 2, %v194
        %v204 = vsel %vm200, 2, %v195
        %s205 = scalar_lea.vmem %s152, 48 [#allocation4]
        %v206 = vld [vmem:[%s205] sm:$0xff]
        %v207 = vld [vmem:[%s205 + $0x8] sm:$0xff]
        %vm208 = vcmp.gt.f32.partialorder %v206, %v201
        %vm209 = vcmp.gt.f32.partialorder %v207, %v202
        %v210 = vsel %vm208, 3, %v203
        %v211 = vsel %vm209, 3, %v204
        %v212 = vld [vmem:[#allocation7] sm:$0xff]
        %v213 = vld [vmem:[#allocation7 + $0x8] sm:$0xff]
        %vm214 = vcmp.eq.s32.totalorder %v210, 0
        %vm215 = vcmp.eq.s32.totalorder %v211, 0
        %v216 = vsel %vm214, 1, 0
        %v217 = vsel %vm215, 1, 0
        %v218 = vcvt.s32.f32 %v216
        %v219 = vcvt.s32.f32 %v217
        %222 = vrot.lane.b32.xlu0 %v218, 1
        %v223 = vpop.permute.xlu0 %222
        %224 = vrot.lane.b32.xlu0 %v219, 1
        %v225 = vpop.permute.xlu0 %224
        %vm228 = vcmask 138248
        %229 = vst.msk [vmem:[#allocation2] sm:$0xff] %vm228, %v223
        %230 = vst.msk [vmem:[#allocation2 + $0x8] sm:$0xff] %vm228, %v225
        %v231 = vld [vmem:[#allocation2] sm:$0xff]
        %v232 = vld [vmem:[#allocation2 + $0x8] sm:$0xff]
        %235 = vrot.lane.b32.xlu0 %v231, 127
        %v236 = vpop.permute.xlu0 %235
        %237 = vrot.lane.b32.xlu0 %v232, 127
        %v238 = vpop.permute.xlu0 %237
        %v241 = vadd.f32 %v231, %v236
        %v242 = vadd.f32 %v232, %v238
        %243 = vrot.lane.b32.xlu0 %v231, 126
        %v244 = vpop.permute.xlu0 %243
        %245 = vrot.lane.b32.xlu0 %v232, 126
        %v246 = vpop.permute.xlu0 %245
        %v249 = vadd.f32 %v241, %v244
        %v250 = vadd.f32 %v242, %v246
        %251 = vst.msk [vmem:[#allocation3 + $0x1] sm:$0xff] %vm180, %v249
        %252 = vst.msk [vmem:[#allocation3 + $0x9] sm:$0xff] %vm180, %v250
        %v253 = vld [vmem:[#allocation3] sm:$0xff]
        %v254 = vld [vmem:[#allocation3 + $0x8] sm:$0xff]
        %v255 = vld [vmem:[#allocation3 + $0x1] sm:$0xff]
        %v256 = vld [vmem:[#allocation3 + $0x9] sm:$0xff]
        %v257 = vadd.f32 %v253, %v255
        %v258 = vadd.f32 %v254, %v256
        %v259 = vld [vmem:[#allocation3 + $0x2] sm:$0xff]
        %v260 = vld [vmem:[#allocation3 + $0xa] sm:$0xff]
        %v261 = vadd.f32 %v257, %v259
        %v262 = vadd.f32 %v258, %v260
        %v263 = vmul.f32 %v261, %v212
        %v264 = vmul.f32 %v262, %v213
        %v265 = vsub.f32 0.0, %v263
        %v266 = vsub.f32 0.0, %v264
        %v267 = vadd.f32 %v263, 1e-06
        %v268 = vadd.f32 %v264, 1e-06
        %v269 = vlog2.pop %v267
        %v270 = vmul.f32 %v269, 0.6931472
        %v271 = vlog2.pop %v268
        %v272 = vmul.f32 %v271, 0.6931472
        %v273 = vmul.f32 %v265, %v270
        %v274 = vmul.f32 %v266, %v272
        %v275 = vadd.f32 %v273, 0.0
        %v276 = vadd.f32 %v274, 0.0
        %vm277 = vcmp.eq.s32.totalorder %v210, 1
        %vm278 = vcmp.eq.s32.totalorder %v211, 1
        %v279 = vsel %vm277, 1, 0
        %v280 = vsel %vm278, 1, 0
        %v281 = vcvt.s32.f32 %v279
        %v282 = vcvt.s32.f32 %v280
        %285 = vrot.lane.b32.xlu0 %v281, 1
        %v286 = vpop.permute.xlu0 %285
        %287 = vrot.lane.b32.xlu0 %v282, 1
        %v288 = vpop.permute.xlu0 %287
        %291 = vst.msk [vmem:[#allocation2] sm:$0xff] %vm228, %v286
        %292 = vst.msk [vmem:[#allocation2 + $0x8] sm:$0xff] %vm228, %v288
        %v293 = vld [vmem:[#allocation2] sm:$0xff]
        %v294 = vld [vmem:[#allocation2 + $0x8] sm:$0xff]
        %297 = vrot.lane.b32.xlu0 %v293, 127
        %v298 = vpop.permute.xlu0 %297
        %299 = vrot.lane.b32.xlu0 %v294, 127
        %v300 = vpop.permute.xlu0 %299
        %v303 = vadd.f32 %v293, %v298
        %v304 = vadd.f32 %v294, %v300
        %305 = vrot.lane.b32.xlu0 %v293, 126
        %v306 = vpop.permute.xlu0 %305
        %307 = vrot.lane.b32.xlu0 %v294, 126
        %v308 = vpop.permute.xlu0 %307
        %v311 = vadd.f32 %v303, %v306
        %v312 = vadd.f32 %v304, %v308
        %313 = vst.msk [vmem:[#allocation3 + $0x1] sm:$0xff] %vm180, %v311
        %314 = vst.msk [vmem:[#allocation3 + $0x9] sm:$0xff] %vm180, %v312
        %v315 = vld [vmem:[#allocation3] sm:$0xff]
        %v316 = vld [vmem:[#allocation3 + $0x8] sm:$0xff]
        %v317 = vld [vmem:[#allocation3 + $0x1] sm:$0xff]
        %v318 = vld [vmem:[#allocation3 + $0x9] sm:$0xff]
        %v319 = vadd.f32 %v315, %v317
        %v320 = vadd.f32 %v316, %v318
        %v321 = vld [vmem:[#allocation3 + $0x2] sm:$0xff]
        %v322 = vld [vmem:[#allocation3 + $0xa] sm:$0xff]
        %v323 = vadd.f32 %v319, %v321
        %v324 = vadd.f32 %v320, %v322
        %v325 = vmul.f32 %v323, %v212
        %v326 = vmul.f32 %v324, %v213
        %v327 = vsub.f32 0.0, %v325
        %v328 = vsub.f32 0.0, %v326
        %v329 = vadd.f32 %v325, 1e-06
        %v330 = vadd.f32 %v326, 1e-06
        %v331 = vlog2.pop %v329
        %v332 = vmul.f32 %v331, 0.6931472
        %v333 = vlog2.pop %v330
        %v334 = vmul.f32 %v333, 0.6931472
        %v335 = vmul.f32 %v327, %v332
        %v336 = vmul.f32 %v328, %v334
        %v337 = vadd.f32 %v275, %v335
        %v338 = vadd.f32 %v276, %v336
        %vm339 = vcmp.eq.s32.totalorder %v210, 2
        %vm340 = vcmp.eq.s32.totalorder %v211, 2
        %v341 = vsel %vm339, 1, 0
        %v342 = vsel %vm340, 1, 0
        %v343 = vcvt.s32.f32 %v341
        %v344 = vcvt.s32.f32 %v342
        %347 = vrot.lane.b32.xlu0 %v343, 1
        %v348 = vpop.permute.xlu0 %347
        %349 = vrot.lane.b32.xlu0 %v344, 1
        %v350 = vpop.permute.xlu0 %349
        %353 = vst.msk [vmem:[#allocation2] sm:$0xff] %vm228, %v348
        %354 = vst.msk [vmem:[#allocation2 + $0x8] sm:$0xff] %vm228, %v350
        %v355 = vld [vmem:[#allocation2] sm:$0xff]
        %v356 = vld [vmem:[#allocation2 + $0x8] sm:$0xff]
        %359 = vrot.lane.b32.xlu0 %v355, 127
        %v360 = vpop.permute.xlu0 %359
        %361 = vrot.lane.b32.xlu0 %v356, 127
        %v362 = vpop.permute.xlu0 %361
        %v365 = vadd.f32 %v355, %v360
        %v366 = vadd.f32 %v356, %v362
        %367 = vrot.lane.b32.xlu0 %v355, 126
        %v368 = vpop.permute.xlu0 %367
        %369 = vrot.lane.b32.xlu0 %v356, 126
        %v370 = vpop.permute.xlu0 %369
        %v373 = vadd.f32 %v365, %v368
        %v374 = vadd.f32 %v366, %v370
        %375 = vst.msk [vmem:[#allocation3 + $0x1] sm:$0xff] %vm180, %v373
        %376 = vst.msk [vmem:[#allocation3 + $0x9] sm:$0xff] %vm180, %v374
        %v377 = vld [vmem:[#allocation3] sm:$0xff]
        %v378 = vld [vmem:[#allocation3 + $0x8] sm:$0xff]
        %v379 = vld [vmem:[#allocation3 + $0x1] sm:$0xff]
        %v380 = vld [vmem:[#allocation3 + $0x9] sm:$0xff]
        %v381 = vadd.f32 %v377, %v379
        %v382 = vadd.f32 %v378, %v380
        %v383 = vld [vmem:[#allocation3 + $0x2] sm:$0xff]
        %v384 = vld [vmem:[#allocation3 + $0xa] sm:$0xff]
        %v385 = vadd.f32 %v381, %v383
        %v386 = vadd.f32 %v382, %v384
        %v387 = vmul.f32 %v385, %v212
        %v388 = vmul.f32 %v386, %v213
        %v389 = vsub.f32 0.0, %v387
        %v390 = vsub.f32 0.0, %v388
        %v391 = vadd.f32 %v387, 1e-06
        %v392 = vadd.f32 %v388, 1e-06
        %v393 = vlog2.pop %v391
        %v394 = vmul.f32 %v393, 0.6931472
        %v395 = vlog2.pop %v392
        %v396 = vmul.f32 %v395, 0.6931472
        %v397 = vmul.f32 %v389, %v394
        %v398 = vmul.f32 %v390, %v396
        %v399 = vadd.f32 %v337, %v397
        %v400 = vadd.f32 %v338, %v398
        %vm401 = vcmp.eq.s32.totalorder %v210, 3
        %vm402 = vcmp.eq.s32.totalorder %v211, 3
        %v403 = vsel %vm401, 1, 0
        %v404 = vsel %vm402, 1, 0
        %v405 = vcvt.s32.f32 %v403
        %v406 = vcvt.s32.f32 %v404
        %409 = vrot.lane.b32.xlu0 %v405, 1
        %v410 = vpop.permute.xlu0 %409
        %411 = vrot.lane.b32.xlu0 %v406, 1
        %v412 = vpop.permute.xlu0 %411
        %415 = vst.msk [vmem:[#allocation2] sm:$0xff] %vm228, %v410
        %416 = vst.msk [vmem:[#allocation2 + $0x8] sm:$0xff] %vm228, %v412
        %v417 = vld [vmem:[#allocation2] sm:$0xff]
        %v418 = vld [vmem:[#allocation2 + $0x8] sm:$0xff]
        %421 = vrot.lane.b32.xlu0 %v417, 127
        %v422 = vpop.permute.xlu0 %421
        %423 = vrot.lane.b32.xlu0 %v418, 127
        %v424 = vpop.permute.xlu0 %423
        %v427 = vadd.f32 %v417, %v422
        %v428 = vadd.f32 %v418, %v424
        %429 = vrot.lane.b32.xlu0 %v417, 126
        %v430 = vpop.permute.xlu0 %429
        %431 = vrot.lane.b32.xlu0 %v418, 126
        %v432 = vpop.permute.xlu0 %431
        %v435 = vadd.f32 %v427, %v430
        %v436 = vadd.f32 %v428, %v432
        %437 = vst.msk [vmem:[#allocation3 + $0x1] sm:$0xff] %vm180, %v435
        %438 = vst.msk [vmem:[#allocation3 + $0x9] sm:$0xff] %vm180, %v436
        %v439 = vld [vmem:[#allocation3] sm:$0xff]
        %v440 = vld [vmem:[#allocation3 + $0x8] sm:$0xff]
        %v441 = vld [vmem:[#allocation3 + $0x1] sm:$0xff]
        %v442 = vld [vmem:[#allocation3 + $0x9] sm:$0xff]
        %v443 = vadd.f32 %v439, %v441
        %v444 = vadd.f32 %v440, %v442
        %v445 = vld [vmem:[#allocation3 + $0x2] sm:$0xff]
        %v446 = vld [vmem:[#allocation3 + $0xa] sm:$0xff]
        %v447 = vadd.f32 %v443, %v445
        %v448 = vadd.f32 %v444, %v446
        %v449 = vmul.f32 %v447, %v212
        %v450 = vmul.f32 %v448, %v213
        %v451 = vsub.f32 0.0, %v449
        %v452 = vsub.f32 0.0, %v450
        %v453 = vadd.f32 %v449, 1e-06
        %v454 = vadd.f32 %v450, 1e-06
        %v455 = vlog2.pop %v453
        %v456 = vmul.f32 %v455, 0.6931472
        %v457 = vlog2.pop %v454
        %v458 = vmul.f32 %v457, 0.6931472
        %v459 = vmul.f32 %v451, %v456
        %v460 = vmul.f32 %v452, %v458
        %v461 = vadd.f32 %v399, %v459
        %v462 = vadd.f32 %v400, %v460
        %v463 = vmul.f32 %v461, 0.7213475
        %v464 = vmul.f32 %v462, 0.7213475
        %465 = vst.msk [vmem:[%s176] sm:$0xff] %vm180, %v463
        %466 = vst.msk [vmem:[%s176 + $0x8] sm:$0xff] %vm180, %v464
        %s467 = sand.u32 %s75, 1
        %s468 = scalar_lea.sflag [#allocation6], %s467
        %s469 = sand.u32 %s75, 1
        %s470 = smul.addr %s469, 16
        %s471 = scalar_lea.vmem [#allocation9], %s470
        // Predicated region
        $region37: #{tpu_custom_call.1} parent=27 // pred_check
          %p472 = pneg %p85
        $region38: #{tpu_custom_call.1} parent=27 // pred_check_branch
          %474 = sbr.rel (%p472) target = $region40
        $region39: #{tpu_custom_call.1} parent=27 // pred_region
          %s476 = ssub.s32 256, 256
          %477 = vsyncadd %s468, %s476
          %s478 = smul.addr %s20, 2
          %s479 = smul.addr %s478, 128
          %s480 = scalar_lea.hbm %s2, %s479
          %s481 = sshll.u32 %s471, 4
          %s482 = int_to_ptr.vmem [resolvable:$true] %s481
          %487 = dma.vmem_to_hbm [thread:$0]  %s482, 256, %s480, %s468, 128, 128, 8
        $region40: #{tpu_custom_call.1} parent=27 // pred_fallthru
          _
      $region28: #{tpu_custom_call.1} parent=5 // pred_fallthru
        _
      %p488 = scmp.le.s32.totalorder 2, %s15
      // Predicated region
      $region41: #{tpu_custom_call.1} parent=5 // pred_check
        %p489 = pneg %p488
      $region42: #{tpu_custom_call.1} parent=5 // pred_check_branch
        %491 = sbr.rel (%p489) target = $region44
      $region43: #{tpu_custom_call.1} parent=5 // pred_region
        %s492 = ssub.s32 %s15, 2
        // Predicated region
        $region45: #{tpu_custom_call.1} parent=43 // pred_check
          %p493 = pneg %p91
        $region46: #{tpu_custom_call.1} parent=43 // pred_check_branch
          %495 = sbr.rel (%p493) target = $region48
        $region47: #{tpu_custom_call.1} parent=43 // pred_region
          %s496 = sand.u32 %s76, 1
          %s497 = scalar_lea.sflag [#allocation6], %s496
          %s498 = sand.u32 %s76, 1
          %s499 = smul.addr %s498, 16
          %s500 = scalar_lea.vmem [#allocation9], %s499
          %501 = dma.done %s497, 256
        $region48: #{tpu_custom_call.1} parent=43 // pred_fallthru
          _
      $region44: #{tpu_custom_call.1} parent=5 // pred_fallthru
        _
    $region6: #{tpu_custom_call.1} parent=1 // loop_footer
      %s19 = sadd.s32 1, %s15
    $region7: #{tpu_custom_call.1} parent=1 // loop_footer_branch
      %14 = sbr.rel target = $region3
    $region8: #{tpu_custom_call.1} parent=1 // loop_exit
      _
    %502 = vsyncpa [#allocation5], 1
    %s503 = scalar_lea.sflag [#allocation5], 1
    %504 = vsyncpa %s503, 1
    %505 = vsyncpa [#allocation8], 1
    %506 = vsyncpa [#allocation6], 1
    %s507 = scalar_lea.sflag [#allocation6], 1
    %508 = vsyncpa %s507, 1

</llo_original>
